<compile_context>
chip_gen: v5e
topology: v5e:2x2
jax: 0.10.0
libtpu: 0.0.40
codegen_flags: <defaults>
</compile_context>

<pallas_src>
import math

import jax
import jax.numpy as jnp
from jax.experimental import pallas as pl
from jax.experimental.pallas import tpu as pltpu

_MiB = 1024 * 1024


# ----------------------------------------------------------------------------
# Buffer construction (mirrors PyTorch __init__)
# ----------------------------------------------------------------------------
def build_pe(d_model: int, period: int = 10, max_len: int = 500) -> jnp.ndarray:
    """Builds the (1, period*(max_len//period+1), d_model) pe buffer (float32)."""
    position = jnp.arange(0, period, dtype=jnp.float32)[:, None]
    div_term = jnp.exp(
        jnp.arange(0, d_model, 2, dtype=jnp.float32) * (-math.log(10000.0) / d_model)
    )
    pe = jnp.zeros((period, d_model), dtype=jnp.float32)
    pe = pe.at[:, 0::2].set(jnp.sin(position * div_term))
    pe = pe.at[:, 1::2].set(jnp.cos(position * div_term))
    pe = pe[None, :, :]
    repeat_num = max_len // period + 1
    return jnp.tile(pe, (1, repeat_num, 1))


# ----------------------------------------------------------------------------
# Generation-aware VMEM budgets
# ----------------------------------------------------------------------------
def _vmem_budgets():
    """Returns (block_budget_bytes, vmem_limit_bytes) for this TPU generation."""
    cap = 128 * _MiB
    try:
        info = pltpu.get_tpu_info()
        c = getattr(info, "vmem_capacity_bytes", None)
        if c:
            cap = int(c)
    except Exception:
        pass
    if cap <= 96 * _MiB:          # v7x-like: 64 MiB VMEM per TensorCore
        return 4 * _MiB, 48 * _MiB
    return 8 * _MiB, 64 * _MiB    # v5e / v6e: 128 MiB physical VMEM


def _largest_divisor_leq(n: int, cap: int) -> int:
    cap = max(1, min(n, cap))
    for d in range(cap, 0, -1):
        if n % d == 0:
            return d
    return 1


# ----------------------------------------------------------------------------
# Pallas kernel: broadcast add (pe kept in f32, add in f32, cast on store)
# ----------------------------------------------------------------------------
def _ppe_add_kernel(x_ref, pe_ref, o_ref):
    o_ref[...] = (x_ref[...].astype(jnp.float32) + pe_ref[...]).astype(o_ref.dtype)


# ----------------------------------------------------------------------------
# Path A: lane-dense 2-D add (cols = S*D multiple of 128)
# ----------------------------------------------------------------------------
def _pallas_add_2d(x2, pe2, block_budget, vmem_limit, want_multi_step):
    rows, cols = x2.shape
    itemsize = jnp.dtype(x2.dtype).itemsize
    assert cols % 128 == 0

    # Row (sublane) tile: multiple of 8 dividing rows, or the full extent.
    if rows % 8 == 0:
        row_tile = 8 * _largest_divisor_leq(rows // 8, 128)      # <= 1024 rows
    else:
        row_tile = rows
        if row_tile * 128 * itemsize > block_budget:
            return None  # cannot budget a full-row block -> let caller fall back

    # Column (lane) tile: budget both the activation block and the f32 pe block.
    units_total = cols // 128
    max_units_x = max(1, block_budget // (row_tile * 128 * itemsize))
    max_units_pe = max(1, block_budget // (128 * 4))
    units = _largest_divisor_leq(units_total, min(max_units_x, max_units_pe))
    col_tile = units * 128

    row_blocks = rows // row_tile
    col_blocks = units_total // units

    # v7x has 2 TensorCores per chip: give medium/large inputs >= 2 parallel
    # grid steps instead of one giant block, so both cores get work.
    if want_multi_step and row_blocks * col_blocks < 2:
        if units_total >= 2:
            units = _largest_divisor_leq(units_total, max(1, units_total // 2))
            col_tile = units * 128
            col_blocks = units_total // units
        elif row_tile % 16 == 0:
            row_tile //= 2
            row_blocks = rows // row_tile

    # Grid: rows innermost -> the pe block index (0, j) is invariant across
    # consecutive steps, so the pipeliner skips redundant pe DMAs.
    grid = (col_blocks, row_blocks)

    return pl.pallas_call(
        _ppe_add_kernel,
        out_shape=jax.ShapeDtypeStruct((rows, cols), x2.dtype),
        grid=grid,
        in_specs=[
            pl.BlockSpec((row_tile, col_tile), lambda j, i: (i, j)),
            pl.BlockSpec((1, col_tile), lambda j, i: (0, j)),
        ],
        out_specs=pl.BlockSpec((row_tile, col_tile), lambda j, i: (i, j)),
        compiler_params=pltpu.CompilerParams(
            dimension_semantics=("parallel", "parallel"),
            vmem_limit_bytes=vmem_limit,
        ),
    )(x2, pe2)


# ----------------------------------------------------------------------------
# Path B: 3-D blocked add for unaligned feature dims (D not a lane multiple)
# ----------------------------------------------------------------------------
def _pallas_add_3d(x, pe3, block_budget, vmem_limit):
    b, s, d = x.shape
    itemsize = jnp.dtype(x.dtype).itemsize

    # Sequence tile: multiple of 8 dividing S, or the full extent; always budgeted.
    if s % 8 == 0:
        k_cap = block_budget // (8 * d * itemsize)
        if k_cap < 1:
            return None
        st = 8 * _largest_divisor_leq(s // 8, k_cap)
    else:
        st = s
        if st * d * itemsize > block_budget:
            return None

    # Batch tile: only grow it when a block already spans the full sequence.
    if st == s:
        bt_cap = max(1, block_budget // (st * d * itemsize))
        bt = _largest_divisor_leq(b, bt_cap)
    else:
        bt = 1

    s_blocks = s // st
    b_blocks = b // bt
    grid = (s_blocks, b_blocks)  # batch innermost -> pe block index invariant

    return pl.pallas_call(
        _ppe_add_kernel,
        out_shape=jax.ShapeDtypeStruct((b, s, d), x.dtype),
        grid=grid,
        in_specs=[
            pl.BlockSpec((bt, st, d), lambda si, bi: (bi, si, 0)),
            pl.BlockSpec((1, st, d), lambda si, bi: (0, si, 0)),
        ],
        out_specs=pl.BlockSpec((bt, st, d), lambda si, bi: (bi, si, 0)),
        compiler_params=pltpu.CompilerParams(
            dimension_semantics=("parallel", "parallel"),
            vmem_limit_bytes=vmem_limit,
        ),
    )(x, pe3)


# ----------------------------------------------------------------------------
# pe slice preparation (cached per (seq_len, layout) by the module object)
# ----------------------------------------------------------------------------
def _prepare_pe(pe_full, s, lane_dense, cache):
    key = (int(s), bool(lane_dense))
    if cache is not None and key in cache:
        return cache[key]
    pe = pe_full[0, :s, :].astype(jnp.float32)          # (s, d) f32
    if lane_dense:
        pe = pe.reshape(1, s * pe.shape[-1])            # (1, s*d)
    else:
        pe = pe[None, :, :]                             # (1, s, d)
    if cache is not None:
        cache[key] = pe
    return pe


# ----------------------------------------------------------------------------
# Functional wrapper (eval-mode forward: x + pe[:, :S, :]; dropout = identity)
# ----------------------------------------------------------------------------
def periodic_positional_encoding(
    x: jnp.ndarray,
    pe_full: jnp.ndarray,
    *,
    min_pallas_bytes: int = 2 * _MiB,
    pe_cache=None,
) -> jnp.ndarray:
    b, s, d = x.shape
    if s > pe_full.shape[1]:
        raise ValueError(
            f"seq_len {s} exceeds positional-encoding length {pe_full.shape[1]}"
        )

    total_bytes = x.size * jnp.dtype(x.dtype).itemsize

    # Small-tensor bailout: let XLA fuse the add instead of paying kernel
    # dispatch + pipeline overhead for a tiny HBM round trip.
    if total_bytes < min_pallas_bytes:
        return (x.astype(jnp.float32) + pe_full[:, :s, :]).astype(x.dtype)

    block_budget, vmem_limit = _vmem_budgets()
    want_multi_step = total_bytes >= 2 * _MiB
    cols = s * d

    if cols % 128 == 0:
        pe2 = _prepare_pe(pe_full, s, lane_dense=True, cache=pe_cache)
        out2 = _pallas_add_2d(
            x.reshape(b, cols), pe2, block_budget, vmem_limit, want_multi_step
        )
        if out2 is not None:
            return out2.reshape(b, s, d)
    else:
        pe3 = _prepare_pe(pe_full, s, lane_dense=False, cache=pe_cache)
        out = _pallas_add_3d(x, pe3, block_budget, vmem_limit)
        if out is not None:
            return out

    # Guarded fallback: shapes whose tiles cannot be budgeted go through XLA
    # rather than risking a VMEM-OOM block.
    return (x.astype(jnp.float32) + pe_full[:, :s, :]).astype(x.dtype)


# ----------------------------------------------------------------------------
# Module-like wrapper (mirrors the PyTorch class; caches prepared pe slices)
# ----------------------------------------------------------------------------
class PeriodicPositionalEncoding:
    def __init__(self, d_model, dropout=0.1, period=10, max_len=500):
        self.d_model = d_model
        self.dropout_p = dropout  # eval-mode: dropout is identity
        self.pe = build_pe(d_model, period=period, max_len=max_len)
        self._pe_cache = {}

    def __call__(self, x, *, min_pallas_bytes: int = 2 * _MiB):
        return periodic_positional_encoding(
            x, self.pe, min_pallas_bytes=min_pallas_bytes, pe_cache=self._pe_cache
        )


# ----------------------------------------------------------------------------
# Reference (pure JAX) for sanity checking
# ----------------------------------------------------------------------------
def reference_forward(x: jnp.ndarray, pe_full: jnp.ndarray) -> jnp.ndarray:
    return (x.astype(jnp.float32) + pe_full[:, : x.shape[1], :]).astype(x.dtype)


if __name__ == "__main__":
    d_model = 32
    module = PeriodicPositionalEncoding(d_model, period=10, max_len=500)

    key = jax.random.PRNGKey(0)
    k1, k2, k3 = jax.random.split(key, 3)

    # 1) Small demo shape: default call takes the small-tensor bailout.
    x_small = jax.random.normal(k1, (2, 8, d_model), dtype=jnp.float32)
    out = jax.block_until_ready(module(x_small))
    ref = reference_forward(x_small, module.pe)
    assert out.shape == x_small.shape
    assert jnp.allclose(out, ref, atol=1e-6, rtol=1e-6)

    # 2) Same shape with the Pallas lane-dense 2-D path forced (cols = 256).
    out_p = jax.block_until_ready(module(x_small, min_pallas_bytes=0))
    assert jnp.allclose(out_p, ref, atol=1e-6, rtol=1e-6)

    # 3) Larger lane-aligned shape, bf16 activations (tiling, swapped grid
    #    order, in-kernel f32 upcast).
    x_b = jax.random.normal(k2, (8, 40, d_model), dtype=jnp.bfloat16)
    out_b = jax.block_until_ready(module(x_b, min_pallas_bytes=0))
    ref_b = reference_forward(x_b, module.pe)
    assert jnp.allclose(
        out_b.astype(jnp.float32), ref_b.astype(jnp.float32), atol=1e-2, rtol=1e-2
    )

    # 4) Unaligned feature dim -> budgeted 3-D blocked path (d=48, s*d % 128 != 0).
    module48 = PeriodicPositionalEncoding(48, period=10, max_len=500)
    x_u = jax.random.normal(k3, (2, 10, 48), dtype=jnp.float32)
    out_u = jax.block_until_ready(module48(x_u, min_pallas_bytes=0))
    ref_u = reference_forward(x_u, module48.pe)
    assert out_u.shape == x_u.shape
    assert jnp.allclose(out_u, ref_u, atol=1e-6, rtol=1e-6)

    print("KERNEL_OK")
</pallas_src>

<mosaic_0001>
module attributes {stable_mosaic.version = 11 : i64} {
  func.func @_ppe_add_kernel(%arg0: i32, %arg1: i32, %arg2: memref<2x256xf32, #tpu.memory_space<vmem>>, %arg3: memref<1x256xf32, #tpu.memory_space<vmem>>, %arg4: memref<2x256xf32, #tpu.memory_space<vmem>>) attributes {dimension_semantics = [#tpu.dimension_semantics<parallel>, #tpu.dimension_semantics<parallel>], iteration_bounds = array<i64: 1, 1>, scalar_prefetch = 0 : i64, scratch_operands = 0 : i64, tpu.core_type = #tpu.core_type<tc>, window_params = [{transform_indices = @transform_0, window_bounds = array<i64: 2, 256>}, {transform_indices = @transform_1, window_bounds = array<i64: 1, 256>}, {transform_indices = @transform_2, window_bounds = array<i64: 2, 256>}]} {
    %c0 = arith.constant 0 : index
    %c0_0 = arith.constant 0 : index
    %0 = vector.load %arg2[%c0, %c0_0] : memref<2x256xf32, #tpu.memory_space<vmem>>, vector<2x256xf32>
    %c0_1 = arith.constant 0 : index
    %c0_2 = arith.constant 0 : index
    %1 = vector.load %arg3[%c0_1, %c0_2] : memref<1x256xf32, #tpu.memory_space<vmem>>, vector<1x256xf32>
    %2 = vector.broadcast %1 : vector<1x256xf32> to vector<2x256xf32>
    %3 = arith.addf %0, %2 : vector<2x256xf32>
    %c0_3 = arith.constant 0 : index
    %c0_4 = arith.constant 0 : index
    %4 = vector.load %arg4[%c0_3, %c0_4] : memref<2x256xf32, #tpu.memory_space<vmem>>, vector<2x256xf32>
    tpu.vector_store %arg4[%c0_3, %c0_4], %3 {strides = array<i32>} : memref<2x256xf32, #tpu.memory_space<vmem>>, vector<2x256xf32>,
    return
  }
  func.func @transform_0(%arg0: i32, %arg1: i32) -> (i32, i32) {
    %c0_i32 = arith.constant 0 : i32
    return %arg1, %arg0 : i32, i32
  }
  func.func @transform_1(%arg0: i32, %arg1: i32) -> (i32, i32) {
    %c0_i32 = arith.constant 0 : i32
    %c0_i32_0 = arith.constant 0 : i32
    return %c0_i32, %arg0 : i32, i32
  }
  func.func @transform_2(%arg0: i32, %arg1: i32) -> (i32, i32) {
    %c0_i32 = arith.constant 0 : i32
    return %arg1, %arg0 : i32, i32
  }
}

</mosaic_0001>

<llo_original>
// kernel: tpu_custom_call.1
$region0: #{tpu_custom_call.1}
  #allocation0 [shape = 'u32[]', space=smem, size = 0x4, offset = 0x4, fixed_abs, tag = 'smem constant byte address 0x4 - core index']
  #allocation1 [shape = 'u32[72,128]{1,0:T(1,128)}', space=vmem, size = 0x9000, scoped, tag = 'internal scratch']
  %s0 = inlined_call_operand.hbm [shape: f32[2,256], index: 0, kind: input, shape index: {}]
  %s1 = inlined_call_operand.hbm [shape: f32[1,256], index: 1, kind: input, shape index: {}]
  %s2 = inlined_call_operand.hbm [shape: f32[2,256], index: 2, kind: output, shape index: {}]
  %s3 = sld [smem:[#allocation0]]
  $region26: #{tpu_custom_call.1} parent=0
    _
  %s5 = ssub.s32 1, %s3
  %s6 = scalar_select 0, %s5, %s3
  $region1: #{tpu_custom_call.1} parent=0
    #allocation2 [shape = 'u8[2048]{0}', space=vmem, size = 0x800, scoped, tag = 'input window, operand 0, single buffered']
    #allocation3 [shape = 's32[1]{0}', space=sflag, size = 0x4, scoped, tag = 'scoped memory for tpu_custom_call.1']
    #allocation4 [shape = 's32[1]{0}', space=sflag, size = 0x4, scoped, tag = 'scoped memory for tpu_custom_call.1']
    #allocation5 [shape = 'u8[1024]{0}', space=vmem, size = 0x400, scoped, tag = 'input window, operand 1, single buffered']
    #allocation6 [shape = 's32[1]{0}', space=sflag, size = 0x4, scoped, tag = 'scoped memory for tpu_custom_call.1']
    #allocation7 [shape = 'u8[2048]{0}', space=vmem, size = 0x800, scoped, tag = 'output window, operand 0, single buffered']
    %7 = vsyncpa [#allocation3], 0
    %8 = vsyncpa [#allocation6], 0
    %9 = vsyncpa [#allocation4], 0
    // Predicated region
    $region2: #{tpu_custom_call.1} parent=1 // pred_check
      _
    $region3: #{tpu_custom_call.1} parent=1 // pred_check_branch
      %11 = sbr.rel (0) target = $region5
    $region4: #{tpu_custom_call.1} parent=1 // pred_region
      %13 = vsyncadd [#allocation3], 0
      %s15 = sshll.u32 %s0, 4
      %s16 = int_to_ptr.hbm [resolvable:$true] %s15
      %s17 = sshll.u32 [#allocation2], 4
      %s18 = int_to_ptr.vmem [resolvable:$true] %s17
      %20 = dma.hbm_to_vmem [thread:$0]  %s16, 64, %s18, [#allocation3]
    $region5: #{tpu_custom_call.1} parent=1 // pred_fallthru
      _
    // Predicated region
    $region6: #{tpu_custom_call.1} parent=1 // pred_check
      _
    $region7: #{tpu_custom_call.1} parent=1 // pred_check_branch
      %22 = sbr.rel (0) target = $region9
    $region8: #{tpu_custom_call.1} parent=1 // pred_region
      %24 = vsyncadd [#allocation6], 0
      %s26 = sshll.u32 %s1, 4
      %s27 = int_to_ptr.hbm [resolvable:$true] %s26
      %s28 = sshll.u32 [#allocation5], 4
      %s29 = int_to_ptr.vmem [resolvable:$true] %s28
      %31 = dma.hbm_to_vmem [thread:$0]  %s27, 32, %s29, [#allocation6]
    $region9: #{tpu_custom_call.1} parent=1 // pred_fallthru
      _
    // Predicated region
    $region10: #{tpu_custom_call.1} parent=1 // pred_check
      _
    $region11: #{tpu_custom_call.1} parent=1 // pred_check_branch
      %33 = sbr.rel (0) target = $region13
    $region12: #{tpu_custom_call.1} parent=1 // pred_region
      %35 = dma.done [#allocation3], 64
    $region13: #{tpu_custom_call.1} parent=1 // pred_fallthru
      _
    // Predicated region
    $region14: #{tpu_custom_call.1} parent=1 // pred_check
      _
    $region15: #{tpu_custom_call.1} parent=1 // pred_check_branch
      %37 = sbr.rel (0) target = $region17
    $region16: #{tpu_custom_call.1} parent=1 // pred_region
      %39 = dma.done [#allocation6], 32
    $region17: #{tpu_custom_call.1} parent=1 // pred_fallthru
      _
    %v40 = vld [vmem:[#allocation2] sm:$0xf]
    %v41 = vld [vmem:[#allocation5] sm:$0x3]
    %v43 = vperm.slane %v41, 0
    %v44 = vperm.slane %v41, 1
    %v45 = vrot.slane %v44, 6
    %vm46 = vcmask 1041408
    %v47 = vsel %vm46, %v43, %v45
    %v49 = vadd.f32 %v40, %v47
    %50 = vst [vmem:[#allocation7] sm:$0xf] %v49
    // Predicated region
    $region18: #{tpu_custom_call.1} parent=1 // pred_check
      _
    $region19: #{tpu_custom_call.1} parent=1 // pred_check_branch
      %52 = sbr.rel (0) target = $region21
    $region20: #{tpu_custom_call.1} parent=1 // pred_region
      %54 = vsyncadd [#allocation4], 0
      %s56 = sshll.u32 [#allocation7], 4
      %s57 = int_to_ptr.vmem [resolvable:$true] %s56
      %s58 = sshll.u32 %s2, 4
      %s59 = int_to_ptr.hbm [resolvable:$true] %s58
      %61 = dma.vmem_to_hbm [thread:$0]  %s57, 64, %s59, [#allocation4]
    $region21: #{tpu_custom_call.1} parent=1 // pred_fallthru
      _
    // Predicated region
    $region22: #{tpu_custom_call.1} parent=1 // pred_check
      _
    $region23: #{tpu_custom_call.1} parent=1 // pred_check_branch
      %63 = sbr.rel (0) target = $region25
    $region24: #{tpu_custom_call.1} parent=1 // pred_region
      %65 = dma.done [#allocation4], 64
    $region25: #{tpu_custom_call.1} parent=1 // pred_fallthru
      _
    %66 = vsyncpa [#allocation3], 1
    %67 = vsyncpa [#allocation6], 1
    %68 = vsyncpa [#allocation4], 1

</llo_original>
